<compile_context>
chip_gen: v7x
topology: tpu7x:2x2x1
jax: 0.10.0
libtpu: 0.0.40
codegen_flags: <defaults>
</compile_context>

<pallas_src>
import math

import jax
import jax.numpy as jnp
from jax.experimental import pallas as pl
from jax.experimental.pallas import tpu as pltpu


def _build_pe_table(max_len: int, d_model: int) -> jnp.ndarray:
    """Deterministic sinusoidal positional-encoding buffer, shape (max_len, d_model)."""
    assert d_model % 2 == 0, "PositionalEncoding requires even d_model (same as PyTorch original)"
    position = jnp.arange(0, max_len, dtype=jnp.float32)[:, None]            # (max_len, 1)
    div_term = jnp.exp(
        jnp.arange(0, d_model, 2, dtype=jnp.float32) * -(math.log(10000.0) / d_model)
    )                                                                         # (d_model/2,)
    pe = jnp.zeros((max_len, d_model), dtype=jnp.float32)
    pe = pe.at[:, 0::2].set(jnp.sin(position * div_term))
    pe = pe.at[:, 1::2].set(jnp.cos(position * div_term))
    return pe


def _pe_add_kernel(x_ref, pe_ref, o_ref):
    # x_ref: (tB, tL) lane-dense tile of the flattened (B, S*D) activations.
    # pe_ref: (1, tL) f32 slab of the flattened pe table (broadcast over batch).
    x = x_ref[...].astype(jnp.float32)
    o_ref[...] = (x + pe_ref[...]).astype(o_ref.dtype)


# Tile caps: tB * tL * 4 B = 2 MiB per buffer -> double-buffered x-in + out
# (+ tiny pe slab) ~ 8 MiB, comfortably under the 32 MiB scoped VMEM limit on
# every generation (incl. v7x's 64 MiB physical VMEM).
_TB_MAX = 128    # sublane tile cap (rows of the flattened (B, S*D) view)
_TL_MAX = 4096   # lane tile cap (multiple of 128)


def _pick_tile(dim: int, unit: int, cap: int) -> int:
    """Largest legal block extent: full dim if small, else a multiple of `unit` <= cap."""
    if dim <= cap:
        return dim                      # full array dim is always a legal block extent
    return max((cap // unit) * unit, unit)


def positional_encoding_forward(x: jnp.ndarray, pe_full: jnp.ndarray) -> jnp.ndarray:
    """x: (B, S, D); pe_full: (max_len, D) f32. Returns x + pe[:S] (eval-mode dropout)."""
    B, S, D = x.shape
    max_len, d_model = pe_full.shape
    assert D == d_model and S <= max_len
    L = S * D

    # Lane-dense view of the activations (free reshape, no data movement).
    x2 = x.reshape(B, L)
    # No wrapper slice of pe: pass the whole flattened table and let the
    # BlockSpec window just the first ceil(L/tL) column tiles.  Row-major
    # flattening preserves the (seq, d_model) order, so pe2[0, :L] is exactly
    # pe_full[:S].reshape(L).  pe stays f32 in VMEM even for bf16 x.
    pe2 = pe_full.reshape(1, max_len * d_model)

    tB = _pick_tile(B, 8, _TB_MAX)      # multiple of 8 sublanes, or the full batch dim
    tL = _pick_tile(L, 128, _TL_MAX)    # multiple of 128 lanes, or the full flattened dim
    grid = (pl.cdiv(L, tL), pl.cdiv(B, tB))   # token/feature tiles outer, batch tiles inner

    out2 = pl.pallas_call(
        _pe_add_kernel,
        out_shape=jax.ShapeDtypeStruct((B, L), x.dtype),
        grid_spec=pltpu.PrefetchScalarGridSpec(
            num_scalar_prefetch=0,
            grid=grid,
            in_specs=[
                pl.BlockSpec((tB, tL), lambda j, b: (b, j)),   # x tile (lane-dense)
                # pe slab: block index constant along the inner batch axis ->
                # stays resident in VMEM across batch tiles, re-DMA'd only per
                # L-tile.
                pl.BlockSpec((1, tL), lambda j, b: (0, j)),
            ],
            out_specs=pl.BlockSpec((tB, tL), lambda j, b: (b, j)),
        ),
        compiler_params=pltpu.CompilerParams(
            dimension_semantics=("parallel", "parallel"),   # no reduction; both TCs get work
            vmem_limit_bytes=32 * 1024 * 1024,
        ),
        # NOTE: input_output_aliases={0: 0} would make the add in-place, but
        # unless the caller donates x it forces an XLA defensive copy (extra
        # HBM read+write), so it is intentionally left off here.
    )(x2, pe2)

    # TODO(synk): training-mode dropout not implemented; eval-mode identity.
    return out2.reshape(B, S, D)


if __name__ == "__main__":
    # ---- Small demo consistent with the module (d_model=32, seq=8, batch=2) ----
    d_model = 32
    dropout_p = 0.1          # unused at inference (identity)
    max_len = 64
    batch, seq = 2, 8

    key = jax.random.PRNGKey(0)
    x = jax.random.normal(key, (batch, seq, d_model), dtype=jnp.float32)
    pe_full = _build_pe_table(max_len, d_model)

    out = jax.block_until_ready(positional_encoding_forward(x, pe_full))
    ref = x + pe_full[None, :seq, :]
    assert out.shape == (batch, seq, d_model)
    assert jnp.allclose(out, ref, atol=1e-6, rtol=1e-6)

    # ---- Second check: exercises L-tiling (L > _TL_MAX) and the bf16 path ----
    d2, s2, b2, ml2 = 64, 128, 16, 256
    key2 = jax.random.PRNGKey(0)
    x2 = jax.random.normal(key2, (b2, s2, d2), dtype=jnp.bfloat16)
    pe2_full = _build_pe_table(ml2, d2)

    out2 = jax.block_until_ready(positional_encoding_forward(x2, pe2_full))
    ref2 = (x2.astype(jnp.float32) + pe2_full[None, :s2, :]).astype(jnp.bfloat16)
    assert out2.shape == (b2, s2, d2)
    assert jnp.allclose(out2.astype(jnp.float32), ref2.astype(jnp.float32),
                        atol=2e-2, rtol=2e-2)

    print("KERNEL_OK")
</pallas_src>

<mosaic_0001>
module attributes {stable_mosaic.version = 11 : i64} {
  func.func @_pe_add_kernel(%arg0: i32, %arg1: i32, %arg2: memref<2x256xf32, #tpu.memory_space<vmem>>, %arg3: memref<1x256xf32, #tpu.memory_space<vmem>>, %arg4: memref<2x256xf32, #tpu.memory_space<vmem>>) attributes {dimension_semantics = [#tpu.dimension_semantics<parallel>, #tpu.dimension_semantics<parallel>], iteration_bounds = array<i64: 1, 1>, scalar_prefetch = 0 : i64, scratch_operands = 0 : i64, tpu.core_type = #tpu.core_type<tc>, window_params = [{transform_indices = @transform_0, window_bounds = array<i64: 2, 256>}, {transform_indices = @transform_1, window_bounds = array<i64: 1, 256>}, {transform_indices = @transform_2, window_bounds = array<i64: 2, 256>}]} {
    %c0 = arith.constant 0 : index
    %c0_0 = arith.constant 0 : index
    %0 = vector.load %arg2[%c0, %c0_0] : memref<2x256xf32, #tpu.memory_space<vmem>>, vector<2x256xf32>
    %c0_1 = arith.constant 0 : index
    %c0_2 = arith.constant 0 : index
    %1 = vector.load %arg3[%c0_1, %c0_2] : memref<1x256xf32, #tpu.memory_space<vmem>>, vector<1x256xf32>
    %2 = vector.broadcast %1 : vector<1x256xf32> to vector<2x256xf32>
    %3 = arith.addf %0, %2 : vector<2x256xf32>
    %c0_3 = arith.constant 0 : index
    %c0_4 = arith.constant 0 : index
    %4 = vector.load %arg4[%c0_3, %c0_4] : memref<2x256xf32, #tpu.memory_space<vmem>>, vector<2x256xf32>
    tpu.vector_store %arg4[%c0_3, %c0_4], %3 {strides = array<i32>} : memref<2x256xf32, #tpu.memory_space<vmem>>, vector<2x256xf32>,
    return
  }
  func.func @transform_0(%arg0: i32, %arg1: i32) -> (i32, i32) {
    %c0_i32 = arith.constant 0 : i32
    return %arg1, %arg0 : i32, i32
  }
  func.func @transform_1(%arg0: i32, %arg1: i32) -> (i32, i32) {
    %c0_i32 = arith.constant 0 : i32
    %c0_i32_0 = arith.constant 0 : i32
    return %c0_i32, %arg0 : i32, i32
  }
  func.func @transform_2(%arg0: i32, %arg1: i32) -> (i32, i32) {
    %c0_i32 = arith.constant 0 : i32
    return %arg1, %arg0 : i32, i32
  }
}

</mosaic_0001>

<llo_original>
// kernel: tpu_custom_call.1
$region0: #{tpu_custom_call.1}
  #allocation0 [shape = 'u32[]', space=smem, size = 0x4, offset = 0x4, fixed_abs, tag = 'smem constant byte address 0x4 - core index']
  #allocation1 [shape = 'u32[144,128]{1,0:T(1,128)}', space=vmem, size = 0x12000, scoped, tag = 'internal scratch']
  %s0 = inlined_call_operand.hbm [shape: f32[2,256], index: 0, kind: input, shape index: {}]
  %s1 = inlined_call_operand.hbm [shape: f32[1,2048], index: 1, kind: input, shape index: {}]
  %s2 = inlined_call_operand.hbm [shape: f32[2,256], index: 2, kind: output, shape index: {}]
  %s3 = sld [smem:[#allocation0]]
  $region26: #{tpu_custom_call.1} parent=0
    _
  %s5 = ssub.s32 1, %s3
  %s6 = scalar_select 0, %s5, %s3
  $region1: #{tpu_custom_call.1} parent=0
    #allocation2 [shape = 'u8[2048]{0}', space=vmem, size = 0x800, scoped, tag = 'input window, operand 0, single buffered']
    #allocation3 [shape = 's32[1]{0}', space=sflag, size = 0x4, scoped, tag = 'scoped memory for tpu_custom_call.1']
    #allocation4 [shape = 's32[1]{0}', space=sflag, size = 0x4, scoped, tag = 'scoped memory for tpu_custom_call.1']
    #allocation5 [shape = 'u8[1024]{0}', space=vmem, size = 0x400, scoped, tag = 'input window, operand 1, single buffered']
    #allocation6 [shape = 's32[1]{0}', space=sflag, size = 0x4, scoped, tag = 'scoped memory for tpu_custom_call.1']
    #allocation7 [shape = 'u8[2048]{0}', space=vmem, size = 0x800, scoped, tag = 'output window, operand 0, single buffered']
    %7 = vsyncpa [#allocation3], 0
    %8 = vsyncpa [#allocation6], 0
    %9 = vsyncpa [#allocation4], 0
    // Predicated region
    $region2: #{tpu_custom_call.1} parent=1 // pred_check
      _
    $region3: #{tpu_custom_call.1} parent=1 // pred_check_branch
      %11 = sbr.rel (0) target = $region5
    $region4: #{tpu_custom_call.1} parent=1 // pred_region
      %s13 = ssub.s32 64, 64
      %14 = vsyncadd [#allocation3], %s13
      %s16 = sshll.u32 [#allocation2], 4
      %s17 = int_to_ptr.vmem [resolvable:$true] %s16
      %19 = dma.hbm_to_vmem [thread:$0]  %s0, 64, %s17, [#allocation3]
    $region5: #{tpu_custom_call.1} parent=1 // pred_fallthru
      _
    // Predicated region
    $region6: #{tpu_custom_call.1} parent=1 // pred_check
      _
    $region7: #{tpu_custom_call.1} parent=1 // pred_check_branch
      %21 = sbr.rel (0) target = $region9
    $region8: #{tpu_custom_call.1} parent=1 // pred_region
      %s23 = ssub.s32 32, 32
      %24 = vsyncadd [#allocation6], %s23
      %s26 = sshll.u32 [#allocation5], 4
      %s27 = int_to_ptr.vmem [resolvable:$true] %s26
      %29 = dma.hbm_to_vmem [thread:$0]  %s1, 32, %s27, [#allocation6]
    $region9: #{tpu_custom_call.1} parent=1 // pred_fallthru
      _
    // Predicated region
    $region10: #{tpu_custom_call.1} parent=1 // pred_check
      _
    $region11: #{tpu_custom_call.1} parent=1 // pred_check_branch
      %31 = sbr.rel (0) target = $region13
    $region12: #{tpu_custom_call.1} parent=1 // pred_region
      %32 = dma.done [#allocation3], 64
    $region13: #{tpu_custom_call.1} parent=1 // pred_fallthru
      _
    // Predicated region
    $region14: #{tpu_custom_call.1} parent=1 // pred_check
      _
    $region15: #{tpu_custom_call.1} parent=1 // pred_check_branch
      %34 = sbr.rel (0) target = $region17
    $region16: #{tpu_custom_call.1} parent=1 // pred_region
      %35 = dma.done [#allocation6], 32
    $region17: #{tpu_custom_call.1} parent=1 // pred_fallthru
      _
    %v36 = vld [vmem:[#allocation2] sm:$0xf]
    %v37 = vld [vmem:[#allocation5] sm:$0x3]
    %v39 = vlaneseq
    %v40 = vshrl.u32 %v39, 7
    %v41 = vsub.s32 0, %v40
    %v42 = vrot.slane %v37, %v41
    %v43 = vlaneseq
    %v44 = vshrl.u32 %v43, 7
    %v45 = vsub.s32 1, %v44
    %v46 = vrot.slane %v37, %v45
    %v47 = vcombine.low %v42, %v46
    %v49 = vunpack.c.l.s4 1983009808
    %v50 = vunpack.c.0.s8 %v49
    %v51 = vlaneseq
    %v52 = vshrl.u32 %v51, 7
    %v53 = vsub.s32 %v50, %v52
    %v54 = vrot.slane %v47, %v53
    %v56 = vadd.f32 %v36, %v54
    %57 = vst [vmem:[#allocation7] sm:$0xf] %v56
    // Predicated region
    $region18: #{tpu_custom_call.1} parent=1 // pred_check
      _
    $region19: #{tpu_custom_call.1} parent=1 // pred_check_branch
      %59 = sbr.rel (0) target = $region21
    $region20: #{tpu_custom_call.1} parent=1 // pred_region
      %s61 = ssub.s32 64, 64
      %62 = vsyncadd [#allocation4], %s61
      %s64 = sshll.u32 [#allocation7], 4
      %s65 = int_to_ptr.vmem [resolvable:$true] %s64
      %67 = dma.vmem_to_hbm [thread:$0]  %s65, 64, %s2, [#allocation4]
    $region21: #{tpu_custom_call.1} parent=1 // pred_fallthru
      _
    // Predicated region
    $region22: #{tpu_custom_call.1} parent=1 // pred_check
      _
    $region23: #{tpu_custom_call.1} parent=1 // pred_check_branch
      %69 = sbr.rel (0) target = $region25
    $region24: #{tpu_custom_call.1} parent=1 // pred_region
      %70 = dma.done [#allocation4], 64
    $region25: #{tpu_custom_call.1} parent=1 // pred_fallthru
      _
    %71 = vsyncpa [#allocation3], 1
    %72 = vsyncpa [#allocation6], 1
    %73 = vsyncpa [#allocation4], 1

</llo_original>
